<compile_context>
chip_gen: v6e
topology: v6e:2x2x1
jax: 0.10.0
libtpu: 0.0.40
codegen_flags: <defaults>
</compile_context>

<pallas_src>
import functools

import jax
import jax.numpy as jnp
from jax import lax
from jax.experimental import pallas as pl
from jax.experimental.pallas import tpu as pltpu

EPS = 1e-5
LANES = 128

_MAX_BLOCK_ROWS = 1024
_TARGET_GRID_STEPS = 8     # >= ~2-4 balanced steps per TensorCore on v7x
_MIN_SPLIT_ROWS = 512      # never shrink a block below this just to add steps


def _cdiv(a, b):
    return -(-a // b)


def _sublane_pack(itemsize):
    # 8 rows/vreg for f32, 16 for bf16/f16, 32 for int8/fp8.
    return max(8, 32 // max(1, int(itemsize)))


@functools.lru_cache(maxsize=None)
def _vmem_budgets():
    """Returns (tile_budget_bytes, vmem_limit_bytes), generation-aware.

    v7x has 64 MiB of VMEM per TensorCore (v5e/v6e: 128 MiB), so use a
    tighter budget there.  The explicit vmem_limit_bytes is required on v5e
    (default scoped VMEM is only 16 MiB) -- keep it.
    """
    cap = None
    try:
        cap = int(pltpu.get_tpu_info().vmem_capacity_bytes)
    except Exception:
        cap = None
    if cap is None or cap <= 64 * 1024 * 1024:
        # v7x (or unknown -> be conservative): 64 MiB physical.
        tile_budget, vmem_limit = 20 * 1024 * 1024, 40 * 1024 * 1024
    else:
        # v5e / v6e: 128 MiB physical.
        tile_budget, vmem_limit = 32 * 1024 * 1024, 48 * 1024 * 1024
    # Keep headroom for compiler-internal scratch.
    assert tile_budget <= vmem_limit - 4 * 1024 * 1024
    return tile_budget, vmem_limit


def _choose_block_rows(rows, dim, itemsize, tile_budget_bytes):
    """Row-tile size that fits the VMEM budget with a sensible grid shape."""
    pack = _sublane_pack(itemsize)
    # Steady-state VMEM per row of tile:
    #   2x input tile + 2x output tile (double-buffered, input dtype)
    # + live full-tile f32 temporaries in the body (centered copy + output
    #   expression; count one extra when the input is sub-32-bit).
    n_f32_temps = 2 if itemsize >= 4 else 3
    per_row_bytes = 4 * dim * int(itemsize) + n_f32_temps * dim * 4
    br = tile_budget_bytes // max(1, per_row_bytes)
    br = max(pack, min(br, _MAX_BLOCK_ROWS))
    br = (br // pack) * pack

    rows_padded = _cdiv(rows, pack) * pack
    br = min(br, rows_padded)

    # For mid/large inputs, aim for several balanced grid steps so both v7x
    # TensorCores get work and the pipeline double-buffers; never shrink a
    # block below _MIN_SPLIT_ROWS.  Tiny inputs keep a single step (per-step
    # overhead is pure loss when there is nothing to overlap).
    if rows_padded >= 2 * _MIN_SPLIT_ROWS and _cdiv(rows_padded, br) < _TARGET_GRID_STEPS:
        candidate = max(_MIN_SPLIT_ROWS, _cdiv(rows_padded, _TARGET_GRID_STEPS))
        candidate = _cdiv(candidate, pack) * pack
        br = min(br, candidate)

    if br >= rows:
        return int(rows)  # single full-extent block: any row count is legal
    return int(br)


def _layernorm_kernel(x_ref, g_ref, b_ref, o_ref):
    """Standard path: feature dim spans the lane axis (dim >= 128 or odd)."""
    x = x_ref[...]                                  # (block_rows, dim), input dtype
    inv_dim = jnp.float32(1.0 / x.shape[-1])
    # Row sum accumulated in f32 without an up-front full-tile f32 copy.
    mean = jnp.sum(x, axis=-1, keepdims=True, dtype=jnp.float32) * inv_dim
    xc = x.astype(jnp.float32) - mean               # only full-tile f32 temp
    # Centered two-pass variance: numerical parity with torch.layer_norm.
    var = jnp.sum(xc * xc, axis=-1, keepdims=True) * inv_dim
    inv = lax.rsqrt(var + EPS)
    o_ref[...] = (xc * (inv * g_ref[...]) + b_ref[...]).astype(o_ref.dtype)


def _layernorm_packed_kernel(x_ref, s_ref, g_ref, b_ref, o_ref, *, inv_dim):
    """Lane-dense path: 128//dim rows folded into each 128-lane group.

    s_ref is a (128,128) block-diagonal 0/1 segment matrix; x @ S broadcasts
    each dim-lane group's sum back to every lane of its group, using the
    otherwise idle MXU.  HIGHEST precision keeps f32 accuracy.
    """
    x = x_ref[...].astype(jnp.float32)              # (block_rows, 128)
    seg = s_ref[...]                                # (128, 128) f32 0/1
    mean = jnp.dot(x, seg, precision=lax.Precision.HIGHEST,
                   preferred_element_type=jnp.float32) * inv_dim
    xc = x - mean
    var = jnp.dot(xc * xc, seg, precision=lax.Precision.HIGHEST,
                  preferred_element_type=jnp.float32) * inv_dim
    inv = lax.rsqrt(var + EPS)
    o_ref[...] = (xc * (inv * g_ref[...]) + b_ref[...]).astype(o_ref.dtype)


@functools.partial(jax.jit, static_argnames=("block_rows",))
def layer_norm(x, gamma, beta, *, block_rows=None):
    """LayerNorm over the last axis of x with learnable gamma and fixed beta."""
    orig_shape = x.shape
    dim = orig_shape[-1]
    rows = 1
    for s in orig_shape[:-1]:
        rows *= s

    tile_budget, vmem_limit = _vmem_budgets()
    itemsize = jnp.dtype(x.dtype).itemsize

    x2 = x.reshape(rows, dim)
    g32 = gamma.reshape(1, dim).astype(jnp.float32)
    b32 = beta.reshape(1, dim).astype(jnp.float32)

    use_packed = (dim < LANES) and (LANES % dim == 0)

    if use_packed:
        # ---- lane-dense path: fold g = 128//dim rows into one 128-lane row ---
        g = LANES // dim
        rows_pad = _cdiv(rows, g) * g
        if rows_pad != rows:
            # Zero padding is benign: padded rows produce finite values (beta)
            # and are sliced off below.
            x2 = jnp.pad(x2, ((0, rows_pad - rows), (0, 0)))
        packed_rows = rows_pad // g
        xp = x2.reshape(packed_rows, LANES)         # contiguous -> free in HBM
        gp = jnp.tile(g32, (1, g))                  # (1, 128)
        bp = jnp.tile(b32, (1, g))                  # (1, 128)
        lane = jnp.arange(LANES)
        seg = (lane[:, None] // dim == lane[None, :] // dim).astype(jnp.float32)

        br = block_rows if block_rows is not None else _choose_block_rows(
            packed_rows, LANES, itemsize, tile_budget)
        grid = (_cdiv(packed_rows, br),)

        out = pl.pallas_call(
            functools.partial(_layernorm_packed_kernel, inv_dim=1.0 / dim),
            out_shape=jax.ShapeDtypeStruct((packed_rows, LANES), x.dtype),
            grid_spec=pltpu.PrefetchScalarGridSpec(
                num_scalar_prefetch=0,
                grid=grid,
                in_specs=[
                    pl.BlockSpec((br, LANES), lambda i: (i, 0)),
                    pl.BlockSpec((LANES, LANES), lambda i: (0, 0)),
                    pl.BlockSpec((1, LANES), lambda i: (0, 0)),
                    pl.BlockSpec((1, LANES), lambda i: (0, 0)),
                ],
                out_specs=pl.BlockSpec((br, LANES), lambda i: (i, 0)),
            ),
            compiler_params=pltpu.CompilerParams(
                dimension_semantics=("parallel",),
                vmem_limit_bytes=vmem_limit,
            ),
        )(xp, seg, gp, bp)

        out = out.reshape(rows_pad, dim)
        if rows_pad != rows:
            out = out[:rows]
        return out.reshape(orig_shape)

    # ---- standard path: feature dim on the lane axis -------------------------
    br = block_rows if block_rows is not None else _choose_block_rows(
        rows, dim, itemsize, tile_budget)
    grid = (_cdiv(rows, br),)

    out = pl.pallas_call(
        _layernorm_kernel,
        out_shape=jax.ShapeDtypeStruct((rows, dim), x.dtype),
        grid_spec=pltpu.PrefetchScalarGridSpec(
            num_scalar_prefetch=0,
            grid=grid,
            in_specs=[
                pl.BlockSpec((br, dim), lambda i: (i, 0)),
                pl.BlockSpec((1, dim), lambda i: (0, 0)),
                pl.BlockSpec((1, dim), lambda i: (0, 0)),
            ],
            out_specs=pl.BlockSpec((br, dim), lambda i: (i, 0)),
        ),
        compiler_params=pltpu.CompilerParams(
            dimension_semantics=("parallel",),
            vmem_limit_bytes=vmem_limit,
        ),
    )(x2, g32, b32)

    return out.reshape(orig_shape)


def layer_norm_reference(x, gamma, beta):
    xf = x.astype(jnp.float32)
    mean = jnp.mean(xf, axis=-1, keepdims=True)
    var = jnp.mean((xf - mean) ** 2, axis=-1, keepdims=True)
    y = (xf - mean) * lax.rsqrt(var + EPS)
    return (y * gamma + beta).astype(x.dtype)


if __name__ == "__main__":
    # Module: LayerNorm(dim) with gamma = ones(dim) (param), beta = zeros(dim) (buffer).
    dim = 32
    batch, seq = 2, 8

    key = jax.random.PRNGKey(0)
    x = jax.random.normal(key, (batch, seq, dim), dtype=jnp.float32)

    # Deterministic parameter init matching nn.Module __init__.
    gamma = jnp.ones((dim,), dtype=jnp.float32)
    beta = jnp.zeros((dim,), dtype=jnp.float32)

    out = layer_norm(x, gamma, beta)
    out = jax.block_until_ready(out)

    ref = layer_norm_reference(x, gamma, beta)
    assert out.shape == x.shape and out.dtype == x.dtype
    assert jnp.allclose(out, ref, atol=1e-5, rtol=1e-5)

    # Non-divisible row count -> exercises the packed path's padded tail.
    x_odd = jax.random.normal(jax.random.PRNGKey(1), (3, 5, dim), dtype=jnp.float32)
    out_odd = jax.block_until_ready(layer_norm(x_odd, gamma, beta))
    ref_odd = layer_norm_reference(x_odd, gamma, beta)
    assert jnp.allclose(out_odd, ref_odd, atol=1e-5, rtol=1e-5)

    # dim multiple of 128 -> exercises the standard (non-packed) path.
    dim_big = 128
    gamma_b = jnp.ones((dim_big,), dtype=jnp.float32)
    beta_b = jnp.zeros((dim_big,), dtype=jnp.float32)
    x_big = jax.random.normal(jax.random.PRNGKey(2), (2, 8, dim_big), dtype=jnp.float32)
    out_big = jax.block_until_ready(layer_norm(x_big, gamma_b, beta_b))
    ref_big = layer_norm_reference(x_big, gamma_b, beta_b)
    assert jnp.allclose(out_big, ref_big, atol=1e-5, rtol=1e-5)

    print("KERNEL_OK")
</pallas_src>

<mosaic_0001>
module attributes {stable_mosaic.version = 11 : i64} {
  func.func @_layernorm_packed_kernel(%arg0: i32, %arg1: memref<4x128xf32, #tpu.memory_space<vmem>>, %arg2: memref<128x128xf32, #tpu.memory_space<vmem>>, %arg3: memref<1x128xf32, #tpu.memory_space<vmem>>, %arg4: memref<1x128xf32, #tpu.memory_space<vmem>>, %arg5: memref<4x128xf32, #tpu.memory_space<vmem>>) attributes {dimension_semantics = [#tpu.dimension_semantics<parallel>], iteration_bounds = array<i64: 1>, scalar_prefetch = 0 : i64, scratch_operands = 0 : i64, tpu.core_type = #tpu.core_type<tc>, window_params = [{transform_indices = @transform_0, window_bounds = array<i64: 4, 128>}, {pipeline_mode = #tpu.pipeline_mode<synchronous>, transform_indices = @transform_1, window_bounds = array<i64: 128, 128>}, {pipeline_mode = #tpu.pipeline_mode<synchronous>, transform_indices = @transform_2, window_bounds = array<i64: 1, 128>}, {pipeline_mode = #tpu.pipeline_mode<synchronous>, transform_indices = @transform_3, window_bounds = array<i64: 1, 128>}, {transform_indices = @transform_4, window_bounds = array<i64: 4, 128>}]} {
    %c0 = arith.constant 0 : index
    %c0_0 = arith.constant 0 : index
    %0 = vector.load %arg1[%c0, %c0_0] : memref<4x128xf32, #tpu.memory_space<vmem>>, vector<4x128xf32>
    %c0_1 = arith.constant 0 : index
    %c0_2 = arith.constant 0 : index
    %1 = vector.load %arg2[%c0_1, %c0_2] : memref<128x128xf32, #tpu.memory_space<vmem>>, vector<128x128xf32>
    %cst = arith.constant dense<0.000000e+00> : vector<4x128xf32>
    %2 = tpu.matmul %0, %1, %cst {dimension_numbers = #tpu.dot_dimension_numbers<[1], [0], [0], [1], [0, 0, 1, 1], [], []>, precision = #tpu.contract_precision<fp32>} : vector<4x128xf32>, vector<128x128xf32>, vector<4x128xf32> -> vector<4x128xf32>
    %cst_3 = arith.constant 3.125000e-02 : f32
    %3 = vector.broadcast %cst_3 : f32 to vector<4x128xf32>
    %4 = arith.mulf %2, %3 : vector<4x128xf32>
    %5 = arith.subf %0, %4 : vector<4x128xf32>
    %6 = arith.mulf %5, %5 : vector<4x128xf32>
    %cst_4 = arith.constant dense<0.000000e+00> : vector<4x128xf32>
    %7 = tpu.matmul %6, %1, %cst_4 {dimension_numbers = #tpu.dot_dimension_numbers<[1], [0], [0], [1], [0, 0, 1, 1], [], []>, precision = #tpu.contract_precision<fp32>} : vector<4x128xf32>, vector<128x128xf32>, vector<4x128xf32> -> vector<4x128xf32>
    %cst_5 = arith.constant 3.125000e-02 : f32
    %8 = vector.broadcast %cst_5 : f32 to vector<4x128xf32>
    %9 = arith.mulf %7, %8 : vector<4x128xf32>
    %cst_6 = arith.constant 9.99999974E-6 : f32
    %10 = vector.broadcast %cst_6 : f32 to vector<4x128xf32>
    %11 = arith.addf %9, %10 : vector<4x128xf32>
    %12 = math.rsqrt %11 : vector<4x128xf32>
    %c0_7 = arith.constant 0 : index
    %c0_8 = arith.constant 0 : index
    %13 = vector.load %arg3[%c0_7, %c0_8] : memref<1x128xf32, #tpu.memory_space<vmem>>, vector<1x128xf32>
    %14 = vector.broadcast %13 : vector<1x128xf32> to vector<4x128xf32>
    %15 = arith.mulf %12, %14 : vector<4x128xf32>
    %16 = arith.mulf %5, %15 : vector<4x128xf32>
    %c0_9 = arith.constant 0 : index
    %c0_10 = arith.constant 0 : index
    %17 = vector.load %arg4[%c0_9, %c0_10] : memref<1x128xf32, #tpu.memory_space<vmem>>, vector<1x128xf32>
    %18 = vector.broadcast %17 : vector<1x128xf32> to vector<4x128xf32>
    %19 = arith.addf %16, %18 : vector<4x128xf32>
    %c0_11 = arith.constant 0 : index
    %c0_12 = arith.constant 0 : index
    %20 = vector.load %arg5[%c0_11, %c0_12] : memref<4x128xf32, #tpu.memory_space<vmem>>, vector<4x128xf32>
    tpu.vector_store %arg5[%c0_11, %c0_12], %19 {strides = array<i32>} : memref<4x128xf32, #tpu.memory_space<vmem>>, vector<4x128xf32>,
    return
  }
  func.func @transform_0(%arg0: i32) -> (i32, i32) {
    %c0_i32 = arith.constant 0 : i32
    %c0_i32_0 = arith.constant 0 : i32
    return %arg0, %c0_i32 : i32, i32
  }
  func.func @transform_1(%arg0: i32) -> (i32, i32) {
    %c0_i32 = arith.constant 0 : i32
    %c0_i32_0 = arith.constant 0 : i32
    %c0_i32_1 = arith.constant 0 : i32
    return %c0_i32, %c0_i32_0 : i32, i32
  }
  func.func @transform_2(%arg0: i32) -> (i32, i32) {
    %c0_i32 = arith.constant 0 : i32
    %c0_i32_0 = arith.constant 0 : i32
    %c0_i32_1 = arith.constant 0 : i32
    return %c0_i32, %c0_i32_0 : i32, i32
  }
  func.func @transform_3(%arg0: i32) -> (i32, i32) {
    %c0_i32 = arith.constant 0 : i32
    %c0_i32_0 = arith.constant 0 : i32
    %c0_i32_1 = arith.constant 0 : i32
    return %c0_i32, %c0_i32_0 : i32, i32
  }
  func.func @transform_4(%arg0: i32) -> (i32, i32) {
    %c0_i32 = arith.constant 0 : i32
    %c0_i32_0 = arith.constant 0 : i32
    return %arg0, %c0_i32 : i32, i32
  }
}

</mosaic_0001>

<llo_original>
// kernel: layer_norm.1
$region0: #{layer_norm.1}
  #allocation0 [shape = 'u32[]', space=smem, size = 0x4, offset = 0x4, fixed_abs, tag = 'smem constant byte address 0x4 - core index']
  #allocation1 [shape = 'u32[144,128]{1,0:T(1,128)}', space=vmem, size = 0x12000, scoped, tag = 'internal scratch']
  %s0 = inlined_call_operand.vmem [shape: f32[4,128], index: 0, kind: input, shape index: {}]
  %s1 = inlined_call_operand.vmem [shape: f32[128,128], index: 1, kind: input, shape index: {}]
  %s2 = inlined_call_operand.vmem [shape: f32[1,128], index: 2, kind: input, shape index: {}]
  %s3 = inlined_call_operand.vmem [shape: f32[1,128], index: 3, kind: input, shape index: {}]
  %s4 = inlined_call_operand.vmem [shape: f32[4,128], index: 4, kind: output, shape index: {}]
  %s5 = sld [smem:[#allocation0]]
  $region26: #{layer_norm.1} parent=0
    _
  %s7 = ssub.s32 1, %s5
  %s8 = scalar_select 0, %s7, %s5
  // Predicated region
  $region2: #{layer_norm.1} parent=0 // pred_check
    _
  $region3: #{layer_norm.1} parent=0 // pred_check_branch
    %10 = sbr.rel (0) target = $region5
  $region4: #{layer_norm.1} parent=0 // pred_region
    _
  $region5: #{layer_norm.1} parent=0 // pred_fallthru
    _
  // Predicated region
  $region6: #{layer_norm.1} parent=0 // pred_check
    _
  $region7: #{layer_norm.1} parent=0 // pred_check_branch
    %12 = sbr.rel (0) target = $region9
  $region8: #{layer_norm.1} parent=0 // pred_region
    _
  $region9: #{layer_norm.1} parent=0 // pred_fallthru
    _
  // Predicated region
  $region10: #{layer_norm.1} parent=0 // pred_check
    _
  $region11: #{layer_norm.1} parent=0 // pred_check_branch
    %14 = sbr.rel (0) target = $region13
  $region12: #{layer_norm.1} parent=0 // pred_region
    _
  $region13: #{layer_norm.1} parent=0 // pred_fallthru
    _
  // Predicated region
  $region14: #{layer_norm.1} parent=0 // pred_check
    _
  $region15: #{layer_norm.1} parent=0 // pred_check_branch
    %16 = sbr.rel (0) target = $region17
  $region16: #{layer_norm.1} parent=0 // pred_region
    _
  $region17: #{layer_norm.1} parent=0 // pred_fallthru
    _
  %v17 = vld [vmem:[%s0] sm:$0xf]
  %v18 = vld [vmem:[%s1] sm:$0xff]
  %v19 = vld [vmem:[%s1 + $0x8] sm:$0xff]
  %v20 = vld [vmem:[%s1 + $0x10] sm:$0xff]
  %v21 = vld [vmem:[%s1 + $0x18] sm:$0xff]
  %v22 = vld [vmem:[%s1 + $0x20] sm:$0xff]
  %v23 = vld [vmem:[%s1 + $0x28] sm:$0xff]
  %v24 = vld [vmem:[%s1 + $0x30] sm:$0xff]
  %v25 = vld [vmem:[%s1 + $0x38] sm:$0xff]
  %v26 = vld [vmem:[%s1 + $0x40] sm:$0xff]
  %v27 = vld [vmem:[%s1 + $0x48] sm:$0xff]
  %v28 = vld [vmem:[%s1 + $0x50] sm:$0xff]
  %v29 = vld [vmem:[%s1 + $0x58] sm:$0xff]
  %v30 = vld [vmem:[%s1 + $0x60] sm:$0xff]
  %v31 = vld [vmem:[%s1 + $0x68] sm:$0xff]
  %v32 = vld [vmem:[%s1 + $0x70] sm:$0xff]
  %v33 = vld [vmem:[%s1 + $0x78] sm:$0xff]
  %34 = vmatprep.subr.mxu0 0.0
  %v35 = vand.u32 %v33, 4294901760
  %36 = vmatpush1.msra.mxu0 %v35
  %37 = vmatprep.subr.mxu0 0.0
  %v38 = vand.u32 %v32, 4294901760
  %39 = vmatpush1.msra.mxu0 %v38
  %40 = vmatprep.subr.mxu0 0.0
  %v41 = vand.u32 %v31, 4294901760
  %42 = vmatpush1.msra.mxu0 %v41
  %43 = vmatprep.subr.mxu0 0.0
  %v44 = vand.u32 %v30, 4294901760
  %45 = vmatpush1.msra.mxu0 %v44
  %46 = vmatprep.subr.mxu0 0.0
  %v47 = vand.u32 %v29, 4294901760
  %48 = vmatpush1.msra.mxu0 %v47
  %49 = vmatprep.subr.mxu0 0.0
  %v50 = vand.u32 %v28, 4294901760
  %51 = vmatpush1.msra.mxu0 %v50
  %52 = vmatprep.subr.mxu0 0.0
  %v53 = vand.u32 %v27, 4294901760
  %54 = vmatpush1.msra.mxu0 %v53
  %55 = vmatprep.subr.mxu0 0.0
  %v56 = vand.u32 %v26, 4294901760
  %57 = vmatpush1.msra.mxu0 %v56
  %58 = vmatprep.subr.mxu0 0.0
  %v59 = vand.u32 %v25, 4294901760
  %60 = vmatpush1.msra.mxu0 %v59
  %61 = vmatprep.subr.mxu0 0.0
  %v62 = vand.u32 %v24, 4294901760
  %63 = vmatpush1.msra.mxu0 %v62
  %64 = vmatprep.subr.mxu0 0.0
  %v65 = vand.u32 %v23, 4294901760
  %66 = vmatpush1.msra.mxu0 %v65
  %67 = vmatprep.subr.mxu0 0.0
  %v68 = vand.u32 %v22, 4294901760
  %69 = vmatpush1.msra.mxu0 %v68
  %70 = vmatprep.subr.mxu0 0.0
  %v71 = vand.u32 %v21, 4294901760
  %72 = vmatpush1.msra.mxu0 %v71
  %73 = vmatprep.subr.mxu0 0.0
  %v74 = vand.u32 %v20, 4294901760
  %75 = vmatpush1.msra.mxu0 %v74
  %76 = vmatprep.subr.mxu0 0.0
  %v77 = vand.u32 %v19, 4294901760
  %78 = vmatpush1.msra.mxu0 %v77
  %79 = vmatprep.subr.mxu0 0.0
  %v80 = vand.u32 %v18, 4294901760
  %81 = vmatpush1.msra.mxu0 %v80
  %82 = vmatprep.subr.mxu0 0.0
  %83 = vmatpush2.msra.mxu0 0.0
  %84 = vmatprep.subr.mxu0 0.0
  %85 = vmatpush2.msra.mxu0 0.0
  %86 = vmatprep.subr.mxu0 0.0
  %87 = vmatpush2.msra.mxu0 0.0
  %88 = vmatprep.subr.mxu0 0.0
  %89 = vmatpush2.msra.mxu0 0.0
  %90 = vmatprep.subr.mxu0 0.0
  %91 = vmatpush2.msra.mxu0 0.0
  %92 = vmatprep.subr.mxu0 0.0
  %93 = vmatpush2.msra.mxu0 0.0
  %94 = vmatprep.subr.mxu0 0.0
  %95 = vmatpush2.msra.mxu0 0.0
  %96 = vmatprep.subr.mxu0 0.0
  %97 = vmatpush2.msra.mxu0 0.0
  %98 = vmatprep.subr.mxu0 0.0
  %99 = vmatpush2.msra.mxu0 0.0
  %100 = vmatprep.subr.mxu0 0.0
  %101 = vmatpush2.msra.mxu0 0.0
  %102 = vmatprep.subr.mxu0 0.0
  %103 = vmatpush2.msra.mxu0 0.0
  %104 = vmatprep.subr.mxu0 0.0
  %105 = vmatpush2.msra.mxu0 0.0
  %106 = vmatprep.subr.mxu0 0.0
  %107 = vmatpush2.msra.mxu0 0.0
  %108 = vmatprep.subr.mxu0 0.0
  %109 = vmatpush2.msra.mxu0 0.0
  %110 = vmatprep.subr.mxu0 0.0
  %111 = vmatpush2.msra.mxu0 0.0
  %112 = vmatprep.subr.mxu0 0.0
  %113 = vmatpush2.msra.mxu0 0.0
  %114 = vmatprep.mubr.f32.mxu0 0.0
  %v115 = vand.u32 %v17, 4294901760
  %v116 = vsub.f32 %v17, %v115
  %v117 = vand.u32 %v116, 4294901760
  %v118 = vsub.f32 %v116, %v117
  %v119 = vand.u32 %v118, 4294901760
  %120 = vmatmul.mubr.f32.gmra.mxu0 %v119
  %v121 = vpop.f32.mrf.mxu0
  %v122 = vadd.f32 0.0, %v121
  %v123 = vpop.f32.mrf.mxu0
  %124 = vdwg.mxu0
  %125 = vmatprep.subr.mxu0 0.0
  %v126 = vand.u32 %v33, 4294901760
  %v127 = vsub.f32 %v33, %v126
  %v128 = vand.u32 %v127, 4294901760
  %v129 = vsub.f32 %v127, %v128
  %v130 = vand.u32 %v129, 4294901760
  %131 = vmatpush1.msra.mxu0 %v130
  %132 = vmatprep.subr.mxu0 0.0
  %v133 = vand.u32 %v32, 4294901760
  %v134 = vsub.f32 %v32, %v133
  %v135 = vand.u32 %v134, 4294901760
  %v136 = vsub.f32 %v134, %v135
  %v137 = vand.u32 %v136, 4294901760
  %138 = vmatpush1.msra.mxu0 %v137
  %139 = vmatprep.subr.mxu0 0.0
  %v140 = vand.u32 %v31, 4294901760
  %v141 = vsub.f32 %v31, %v140
  %v142 = vand.u32 %v141, 4294901760
  %v143 = vsub.f32 %v141, %v142
  %v144 = vand.u32 %v143, 4294901760
  %145 = vmatpush1.msra.mxu0 %v144
  %146 = vmatprep.subr.mxu0 0.0
  %v147 = vand.u32 %v30, 4294901760
  %v148 = vsub.f32 %v30, %v147
  %v149 = vand.u32 %v148, 4294901760
  %v150 = vsub.f32 %v148, %v149
  %v151 = vand.u32 %v150, 4294901760
  %152 = vmatpush1.msra.mxu0 %v151
  %153 = vmatprep.subr.mxu0 0.0
  %v154 = vand.u32 %v29, 4294901760
  %v155 = vsub.f32 %v29, %v154
  %v156 = vand.u32 %v155, 4294901760
  %v157 = vsub.f32 %v155, %v156
  %v158 = vand.u32 %v157, 4294901760
  %159 = vmatpush1.msra.mxu0 %v158
  %160 = vmatprep.subr.mxu0 0.0
  %v161 = vand.u32 %v28, 4294901760
  %v162 = vsub.f32 %v28, %v161
  %v163 = vand.u32 %v162, 4294901760
  %v164 = vsub.f32 %v162, %v163
  %v165 = vand.u32 %v164, 4294901760
  %166 = vmatpush1.msra.mxu0 %v165
  %167 = vmatprep.subr.mxu0 0.0
  %v168 = vand.u32 %v27, 4294901760
  %v169 = vsub.f32 %v27, %v168
  %v170 = vand.u32 %v169, 4294901760
  %v171 = vsub.f32 %v169, %v170
  %v172 = vand.u32 %v171, 4294901760
  %173 = vmatpush1.msra.mxu0 %v172
  %174 = vmatprep.subr.mxu0 0.0
  %v175 = vand.u32 %v26, 4294901760
  %v176 = vsub.f32 %v26, %v175
  %v177 = vand.u32 %v176, 4294901760
  %v178 = vsub.f32 %v176, %v177
  %v179 = vand.u32 %v178, 4294901760
  %180 = vmatpush1.msra.mxu0 %v179
  %181 = vmatprep.subr.mxu0 0.0
  %v182 = vand.u32 %v25, 4294901760
  %v183 = vsub.f32 %v25, %v182
  %v184 = vand.u32 %v183, 4294901760
  %v185 = vsub.f32 %v183, %v184
  %v186 = vand.u32 %v185, 4294901760
  %187 = vmatpush1.msra.mxu0 %v186
  %188 = vmatprep.subr.mxu0 0.0
  %v189 = vand.u32 %v24, 4294901760
  %v190 = vsub.f32 %v24, %v189
  %v191 = vand.u32 %v190, 4294901760
  %v192 = vsub.f32 %v190, %v191
  %v193 = vand.u32 %v192, 4294901760
  %194 = vmatpush1.msra.mxu0 %v193
  %195 = vmatprep.subr.mxu0 0.0
  %v196 = vand.u32 %v23, 4294901760
  %v197 = vsub.f32 %v23, %v196
  %v198 = vand.u32 %v197, 4294901760
  %v199 = vsub.f32 %v197, %v198
  %v200 = vand.u32 %v199, 4294901760
  %201 = vmatpush1.msra.mxu0 %v200
  %202 = vmatprep.subr.mxu0 0.0
  %v203 = vand.u32 %v22, 4294901760
  %v204 = vsub.f32 %v22, %v203
  %v205 = vand.u32 %v204, 4294901760
  %v206 = vsub.f32 %v204, %v205
  %v207 = vand.u32 %v206, 4294901760
  %208 = vmatpush1.msra.mxu0 %v207
  %209 = vmatprep.subr.mxu0 0.0
  %v210 = vand.u32 %v21, 4294901760
  %v211 = vsub.f32 %v21, %v210
  %v212 = vand.u32 %v211, 4294901760
  %v213 = vsub.f32 %v211, %v212
  %v214 = vand.u32 %v213, 4294901760
  %215 = vmatpush1.msra.mxu0 %v214
  %216 = vmatprep.subr.mxu0 0.0
  %v217 = vand.u32 %v20, 4294901760
  %v218 = vsub.f32 %v20, %v217
  %v219 = vand.u32 %v218, 4294901760
  %v220 = vsub.f32 %v218, %v219
  %v221 = vand.u32 %v220, 4294901760
  %222 = vmatpush1.msra.mxu0 %v221
  %223 = vmatprep.subr.mxu0 0.0
  %v224 = vand.u32 %v19, 4294901760
  %v225 = vsub.f32 %v19, %v224
  %v226 = vand.u32 %v225, 4294901760
  %v227 = vsub.f32 %v225, %v226
  %v228 = vand.u32 %v227, 4294901760
  %229 = vmatpush1.msra.mxu0 %v228
  %230 = vmatprep.subr.mxu0 0.0
  %v231 = vand.u32 %v18, 4294901760
  %v232 = vsub.f32 %v18, %v231
  %v233 = vand.u32 %v232, 4294901760
  %v234 = vsub.f32 %v232, %v233
  %v235 = vand.u32 %v234, 4294901760
  %236 = vmatpush1.msra.mxu0 %v235
  %237 = vmatprep.subr.mxu0 0.0
  %238 = vmatpush2.msra.mxu0 0.0
  %239 = vmatprep.subr.mxu0 0.0
  %240 = vmatpush2.msra.mxu0 0.0
  %241 = vmatprep.subr.mxu0 0.0
  %242 = vmatpush2.msra.mxu0 0.0
  %243 = vmatprep.subr.mxu0 0.0
  %244 = vmatpush2.msra.mxu0 0.0
  %245 = vmatprep.subr.mxu0 0.0
  %246 = vmatpush2.msra.mxu0 0.0
  %247 = vmatprep.subr.mxu0 0.0
  %248 = vmatpush2.msra.mxu0 0.0
  %249 = vmatprep.subr.mxu0 0.0
  %250 = vmatpush2.msra.mxu0 0.0
  %251 = vmatprep.subr.mxu0 0.0
  %252 = vmatpush2.msra.mxu0 0.0
  %253 = vmatprep.subr.mxu0 0.0
  %254 = vmatpush2.msra.mxu0 0.0
  %255 = vmatprep.subr.mxu0 0.0
  %256 = vmatpush2.msra.mxu0 0.0
  %257 = vmatprep.subr.mxu0 0.0
  %258 = vmatpush2.msra.mxu0 0.0
  %259 = vmatprep.subr.mxu0 0.0
  %260 = vmatpush2.msra.mxu0 0.0
  %261 = vmatprep.subr.mxu0 0.0
  %262 = vmatpush2.msra.mxu0 0.0
  %263 = vmatprep.subr.mxu0 0.0
  %264 = vmatpush2.msra.mxu0 0.0
  %265 = vmatprep.subr.mxu0 0.0
  %266 = vmatpush2.msra.mxu0 0.0
  %267 = vmatprep.subr.mxu0 0.0
  %268 = vmatpush2.msra.mxu0 0.0
  %269 = vmatprep.mubr.f32.mxu0 0.0
  %v270 = vand.u32 %v17, 4294901760
  %271 = vmatmul.mubr.f32.gmra.mxu0 %v270
  %v272 = vpop.f32.mrf.mxu0
  %v273 = vadd.f32 %v122, %v272
  %v274 = vpop.f32.mrf.mxu0
  %275 = vdwg.mxu0
  %276 = vmatprep.subr.mxu0 0.0
  %v277 = vand.u32 %v33, 4294901760
  %v278 = vsub.f32 %v33, %v277
  %279 = vmatpush1.msra.mxu0 %v278
  %280 = vmatprep.subr.mxu0 0.0
  %v281 = vand.u32 %v32, 4294901760
  %v282 = vsub.f32 %v32, %v281
  %283 = vmatpush1.msra.mxu0 %v282
  %284 = vmatprep.subr.mxu0 0.0
  %v285 = vand.u32 %v31, 4294901760
  %v286 = vsub.f32 %v31, %v285
  %287 = vmatpush1.msra.mxu0 %v286
  %288 = vmatprep.subr.mxu0 0.0
  %v289 = vand.u32 %v30, 4294901760
  %v290 = vsub.f32 %v30, %v289
  %291 = vmatpush1.msra.mxu0 %v290
  %292 = vmatprep.subr.mxu0 0.0
  %v293 = vand.u32 %v29, 4294901760
  %v294 = vsub.f32 %v29, %v293
  %295 = vmatpush1.msra.mxu0 %v294
  %296 = vmatprep.subr.mxu0 0.0
  %v297 = vand.u32 %v28, 4294901760
  %v298 = vsub.f32 %v28, %v297
  %299 = vmatpush1.msra.mxu0 %v298
  %300 = vmatprep.subr.mxu0 0.0
  %v301 = vand.u32 %v27, 4294901760
  %v302 = vsub.f32 %v27, %v301
  %303 = vmatpush1.msra.mxu0 %v302
  %304 = vmatprep.subr.mxu0 0.0
  %v305 = vand.u32 %v26, 4294901760
  %v306 = vsub.f32 %v26, %v305
  %307 = vmatpush1.msra.mxu0 %v306
  %308 = vmatprep.subr.mxu0 0.0
  %v309 = vand.u32 %v25, 4294901760
  %v310 = vsub.f32 %v25, %v309
  %311 = vmatpush1.msra.mxu0 %v310
  %312 = vmatprep.subr.mxu0 0.0
  %v313 = vand.u32 %v24, 4294901760
  %v314 = vsub.f32 %v24, %v313
  %315 = vmatpush1.msra.mxu0 %v314
  %316 = vmatprep.subr.mxu0 0.0
  %v317 = vand.u32 %v23, 4294901760
  %v318 = vsub.f32 %v23, %v317
  %319 = vmatpush1.msra.mxu0 %v318
  %320 = vmatprep.subr.mxu0 0.0
  %v321 = vand.u32 %v22, 4294901760
  %v322 = vsub.f32 %v22, %v321
  %323 = vmatpush1.msra.mxu0 %v322
  %324 = vmatprep.subr.mxu0 0.0
  %v325 = vand.u32 %v21, 4294901760
  %v326 = vsub.f32 %v21, %v325
  %327 = vmatpush1.msra.mxu0 %v326
  %328 = vmatprep.subr.mxu0 0.0
  %v329 = vand.u32 %v20, 4294901760
  %v330 = vsub.f32 %v20, %v329
  %331 = vmatpush1.msra.mxu0 %v330
  %332 = vmatprep.subr.mxu0 0.0
  %v333 = vand.u32 %v19, 4294901760
  %v334 = vsub.f32 %v19, %v333
  %335 = vmatpush1.msra.mxu0 %v334
  %336 = vmatprep.subr.mxu0 0.0
  %v337 = vand.u32 %v18, 4294901760
  %v338 = vsub.f32 %v18, %v337
  %339 = vmatpush1.msra.mxu0 %v338
  %340 = vmatprep.subr.mxu0 0.0
  %341 = vmatpush2.msra.mxu0 0.0
  %342 = vmatprep.subr.mxu0 0.0
  %343 = vmatpush2.msra.mxu0 0.0
  %344 = vmatprep.subr.mxu0 0.0
  %345 = vmatpush2.msra.mxu0 0.0
  %346 = vmatprep.subr.mxu0 0.0
  %347 = vmatpush2.msra.mxu0 0.0
  %348 = vmatprep.subr.mxu0 0.0
  %349 = vmatpush2.msra.mxu0 0.0
  %350 = vmatprep.subr.mxu0 0.0
  %351 = vmatpush2.msra.mxu0 0.0
  %352 = vmatprep.subr.mxu0 0.0
  %353 = vmatpush2.msra.mxu0 0.0
  %354 = vmatprep.subr.mxu0 0.0
  %355 = vmatpush2.msra.mxu0 0.0
  %356 = vmatprep.subr.mxu0 0.0
  %357 = vmatpush2.msra.mxu0 0.0
  %358 = vmatprep.subr.mxu0 0.0
  %359 = vmatpush2.msra.mxu0 0.0
  %360 = vmatprep.subr.mxu0 0.0
  %361 = vmatpush2.msra.mxu0 0.0
  %362 = vmatprep.subr.mxu0 0.0
  %363 = vmatpush2.msra.mxu0 0.0
  %364 = vmatprep.subr.mxu0 0.0
  %365 = vmatpush2.msra.mxu0 0.0
  %366 = vmatprep.subr.mxu0 0.0
  %367 = vmatpush2.msra.mxu0 0.0
  %368 = vmatprep.subr.mxu0 0.0
  %369 = vmatpush2.msra.mxu0 0.0
  %370 = vmatprep.subr.mxu0 0.0
  %371 = vmatpush2.msra.mxu0 0.0
  %372 = vmatprep.mubr.f32.mxu0 0.0
  %v373 = vand.u32 %v17, 4294901760
  %v374 = vsub.f32 %v17, %v373
  %375 = vmatmul.mubr.f32.gmra.mxu0 %v374
  %v376 = vpop.f32.mrf.mxu0
  %v377 = vadd.f32 %v273, %v376
  %v378 = vpop.f32.mrf.mxu0
  %379 = vdwg.mxu0
  %380 = vmatprep.subr.mxu0 0.0
  %v381 = vand.u32 %v33, 4294901760
  %382 = vmatpush1.msra.mxu0 %v381
  %383 = vmatprep.subr.mxu0 0.0
  %v384 = vand.u32 %v32, 4294901760
  %385 = vmatpush1.msra.mxu0 %v384
  %386 = vmatprep.subr.mxu0 0.0
  %v387 = vand.u32 %v31, 4294901760
  %388 = vmatpush1.msra.mxu0 %v387
  %389 = vmatprep.subr.mxu0 0.0
  %v390 = vand.u32 %v30, 4294901760
  %391 = vmatpush1.msra.mxu0 %v390
  %392 = vmatprep.subr.mxu0 0.0
  %v393 = vand.u32 %v29, 4294901760
  %394 = vmatpush1.msra.mxu0 %v393
  %395 = vmatprep.subr.mxu0 0.0
  %v396 = vand.u32 %v28, 4294901760
  %397 = vmatpush1.msra.mxu0 %v396
  %398 = vmatprep.subr.mxu0 0.0
  %v399 = vand.u32 %v27, 4294901760
  %400 = vmatpush1.msra.mxu0 %v399
  %401 = vmatprep.subr.mxu0 0.0
  %v402 = vand.u32 %v26, 4294901760
  %403 = vmatpush1.msra.mxu0 %v402
  %404 = vmatprep.subr.mxu0 0.0
  %v405 = vand.u32 %v25, 4294901760
  %406 = vmatpush1.msra.mxu0 %v405
  %407 = vmatprep.subr.mxu0 0.0
  %v408 = vand.u32 %v24, 4294901760
  %409 = vmatpush1.msra.mxu0 %v408
  %410 = vmatprep.subr.mxu0 0.0
  %v411 = vand.u32 %v23, 4294901760
  %412 = vmatpush1.msra.mxu0 %v411
  %413 = vmatprep.subr.mxu0 0.0
  %v414 = vand.u32 %v22, 4294901760
  %415 = vmatpush1.msra.mxu0 %v414
  %416 = vmatprep.subr.mxu0 0.0
  %v417 = vand.u32 %v21, 4294901760
  %418 = vmatpush1.msra.mxu0 %v417
  %419 = vmatprep.subr.mxu0 0.0
  %v420 = vand.u32 %v20, 4294901760
  %421 = vmatpush1.msra.mxu0 %v420
  %422 = vmatprep.subr.mxu0 0.0
  %v423 = vand.u32 %v19, 4294901760
  %424 = vmatpush1.msra.mxu0 %v423
  %425 = vmatprep.subr.mxu0 0.0
  %v426 = vand.u32 %v18, 4294901760
  %427 = vmatpush1.msra.mxu0 %v426
  %428 = vmatprep.subr.mxu0 0.0
  %429 = vmatpush2.msra.mxu0 0.0
  %430 = vmatprep.subr.mxu0 0.0
  %431 = vmatpush2.msra.mxu0 0.0
  %432 = vmatprep.subr.mxu0 0.0
  %433 = vmatpush2.msra.mxu0 0.0
  %434 = vmatprep.subr.mxu0 0.0
  %435 = vmatpush2.msra.mxu0 0.0
  %436 = vmatprep.subr.mxu0 0.0
  %437 = vmatpush2.msra.mxu0 0.0
  %438 = vmatprep.subr.mxu0 0.0
  %439 = vmatpush2.msra.mxu0 0.0
  %440 = vmatprep.subr.mxu0 0.0
  %441 = vmatpush2.msra.mxu0 0.0
  %442 = vmatprep.subr.mxu0 0.0
  %443 = vmatpush2.msra.mxu0 0.0
  %444 = vmatprep.subr.mxu0 0.0
  %445 = vmatpush2.msra.mxu0 0.0
  %446 = vmatprep.subr.mxu0 0.0
  %447 = vmatpush2.msra.mxu0 0.0
  %448 = vmatprep.subr.mxu0 0.0
  %449 = vmatpush2.msra.mxu0 0.0
  %450 = vmatprep.subr.mxu0 0.0
  %451 = vmatpush2.msra.mxu0 0.0
  %452 = vmatprep.subr.mxu0 0.0
  %453 = vmatpush2.msra.mxu0 0.0
  %454 = vmatprep.subr.mxu0 0.0
  %455 = vmatpush2.msra.mxu0 0.0
  %456 = vmatprep.subr.mxu0 0.0
  %457 = vmatpush2.msra.mxu0 0.0
  %458 = vmatprep.subr.mxu0 0.0
  %459 = vmatpush2.msra.mxu0 0.0
  %460 = vmatprep.mubr.f32.mxu0 0.0
  %v461 = vand.u32 %v17, 4294901760
  %v462 = vsub.f32 %v17, %v461
  %v463 = vand.u32 %v462, 4294901760
  %464 = vmatmul.mubr.f32.gmra.mxu0 %v463
  %v465 = vpop.f32.mrf.mxu0
  %v466 = vadd.f32 %v377, %v465
  %v467 = vpop.f32.mrf.mxu0
  %468 = vdwg.mxu0
  %469 = vmatprep.subr.mxu0 0.0
  %v470 = vand.u32 %v33, 4294901760
  %v471 = vsub.f32 %v33, %v470
  %v472 = vand.u32 %v471, 4294901760
  %473 = vmatpush1.msra.mxu0 %v472
  %474 = vmatprep.subr.mxu0 0.0
  %v475 = vand.u32 %v32, 4294901760
  %v476 = vsub.f32 %v32, %v475
  %v477 = vand.u32 %v476, 4294901760
  %478 = vmatpush1.msra.mxu0 %v477
  %479 = vmatprep.subr.mxu0 0.0
  %v480 = vand.u32 %v31, 4294901760
  %v481 = vsub.f32 %v31, %v480
  %v482 = vand.u32 %v481, 4294901760
  %483 = vmatpush1.msra.mxu0 %v482
  %484 = vmatprep.subr.mxu0 0.0
  %v485 = vand.u32 %v30, 4294901760
  %v486 = vsub.f32 %v30, %v485
  %v487 = vand.u32 %v486, 4294901760
  %488 = vmatpush1.msra.mxu0 %v487
  %489 = vmatprep.subr.mxu0 0.0
  %v490 = vand.u32 %v29, 4294901760
  %v491 = vsub.f32 %v29, %v490
  %v492 = vand.u32 %v491, 4294901760
  %493 = vmatpush1.msra.mxu0 %v492
  %494 = vmatprep.subr.mxu0 0.0
  %v495 = vand.u32 %v28, 4294901760
  %v496 = vsub.f32 %v28, %v495
  %v497 = vand.u32 %v496, 4294901760
  %498 = vmatpush1.msra.mxu0 %v497
  %499 = vmatprep.subr.mxu0 0.0
  %v500 = vand.u32 %v27, 4294901760
  %v501 = vsub.f32 %v27, %v500
  %v502 = vand.u32 %v501, 4294901760
  %503 = vmatpush1.msra.mxu0 %v502
  %504 = vmatprep.subr.mxu0 0.0
  %v505 = vand.u32 %v26, 4294901760
  %v506 = vsub.f32 %v26, %v505
  %v507 = vand.u32 %v506, 4294901760
  %508 = vmatpush1.msra.mxu0 %v507
  %509 = vmatprep.subr.mxu0 0.0
  %v510 = vand.u32 %v25, 4294901760
  %v511 = vsub.f32 %v25, %v510
  %v512 = vand.u32 %v511, 4294901760
  %513 = vmatpush1.msra.mxu0 %v512
  %514 = vmatprep.subr.mxu0 0.0
  %v515 = vand.u32 %v24, 4294901760
  %v516 = vsub.f32 %v24, %v515
  %v517 = vand.u32 %v516, 4294901760
  %518 = vmatpush1.msra.mxu0 %v517
  %519 = vmatprep.subr.mxu0 0.0
  %v520 = vand.u32 %v23, 4294901760
  %v521 = vsub.f32 %v23, %v520
  %v522 = vand.u32 %v521, 4294901760
  %523 = vmatpush1.msra.mxu0 %v522
  %524 = vmatprep.subr.mxu0 0.0
  %v525 = vand.u32 %v22, 4294901760
  %v526 = vsub.f32 %v22, %v525
  %v527 = vand.u32 %v526, 4294901760
  %528 = vmatpush1.msra.mxu0 %v527
  %529 = vmatprep.subr.mxu0 0.0
  %v530 = vand.u32 %v21, 4294901760
  %v531 = vsub.f32 %v21, %v530
  %v532 = vand.u32 %v531, 4294901760
  %533 = vmatpush1.msra.mxu0 %v532
  %534 = vmatprep.subr.mxu0 0.0
  %v535 = vand.u32 %v20, 4294901760
  %v536 = vsub.f32 %v20, %v535
  %v537 = vand.u32 %v536, 4294901760
  %538 = vmatpush1.msra.mxu0 %v537
  %539 = vmatprep.subr.mxu0 0.0
  %v540 = vand.u32 %v19, 4294901760
  %v541 = vsub.f32 %v19, %v540
  %v542 = vand.u32 %v541, 4294901760
  %543 = vmatpush1.msra.mxu0 %v542
  %544 = vmatprep.subr.mxu0 0.0
  %v545 = vand.u32 %v18, 4294901760
  %v546 = vsub.f32 %v18, %v545
  %v547 = vand.u32 %v546, 4294901760
  %548 = vmatpush1.msra.mxu0 %v547
  %549 = vmatprep.subr.mxu0 0.0
  %550 = vmatpush2.msra.mxu0 0.0
  %551 = vmatprep.subr.mxu0 0.0
  %552 = vmatpush2.msra.mxu0 0.0
  %553 = vmatprep.subr.mxu0 0.0
  %554 = vmatpush2.msra.mxu0 0.0
  %555 = vmatprep.subr.mxu0 0.0
  %556 = vmatpush2.msra.mxu0 0.0
  %557 = vmatprep.subr.mxu0 0.0
  %558 = vmatpush2.msra.mxu0 0.0
  %559 = vmatprep.subr.mxu0 0.0
  %560 = vmatpush2.msra.mxu0 0.0
  %561 = vmatprep.subr.mxu0 0.0
  %562 = vmatpush2.msra.mxu0 0.0
  %563 = vmatprep.subr.mxu0 0.0
  %564 = vmatpush2.msra.mxu0 0.0
  %565 = vmatprep.subr.mxu0 0.0
  %566 = vmatpush2.msra.mxu0 0.0
  %567 = vmatprep.subr.mxu0 0.0
  %568 = vmatpush2.msra.mxu0 0.0
  %569 = vmatprep.subr.mxu0 0.0
  %570 = vmatpush2.msra.mxu0 0.0
  %571 = vmatprep.subr.mxu0 0.0
  %572 = vmatpush2.msra.mxu0 0.0
  %573 = vmatprep.subr.mxu0 0.0
  %574 = vmatpush2.msra.mxu0 0.0
  %575 = vmatprep.subr.mxu0 0.0
  %576 = vmatpush2.msra.mxu0 0.0
  %577 = vmatprep.subr.mxu0 0.0
  %578 = vmatpush2.msra.mxu0 0.0
  %579 = vmatprep.subr.mxu0 0.0
  %580 = vmatpush2.msra.mxu0 0.0
  %581 = vmatprep.mubr.f32.mxu0 0.0
  %v582 = vand.u32 %v17, 4294901760
  %583 = vmatmul.mubr.f32.gmra.mxu0 %v582
  %v584 = vpop.f32.mrf.mxu0
  %v585 = vadd.f32 %v466, %v584
  %v586 = vpop.f32.mrf.mxu0
  %587 = vdwg.mxu0
  %588 = vmatprep.subr.mxu0 0.0
  %v589 = vand.u32 %v33, 4294901760
  %590 = vmatpush1.msra.mxu0 %v589
  %591 = vmatprep.subr.mxu0 0.0
  %v592 = vand.u32 %v32, 4294901760
  %593 = vmatpush1.msra.mxu0 %v592
  %594 = vmatprep.subr.mxu0 0.0
  %v595 = vand.u32 %v31, 4294901760
  %596 = vmatpush1.msra.mxu0 %v595
  %597 = vmatprep.subr.mxu0 0.0
  %v598 = vand.u32 %v30, 4294901760
  %599 = vmatpush1.msra.mxu0 %v598
  %600 = vmatprep.subr.mxu0 0.0
  %v601 = vand.u32 %v29, 4294901760
  %602 = vmatpush1.msra.mxu0 %v601
  %603 = vmatprep.subr.mxu0 0.0
  %v604 = vand.u32 %v28, 4294901760
  %605 = vmatpush1.msra.mxu0 %v604
  %606 = vmatprep.subr.mxu0 0.0
  %v607 = vand.u32 %v27, 4294901760
  %608 = vmatpush1.msra.mxu0 %v607
  %609 = vmatprep.subr.mxu0 0.0
  %v610 = vand.u32 %v26, 4294901760
  %611 = vmatpush1.msra.mxu0 %v610
  %612 = vmatprep.subr.mxu0 0.0
  %v613 = vand.u32 %v25, 4294901760
  %614 = vmatpush1.msra.mxu0 %v613
  %615 = vmatprep.subr.mxu0 0.0
  %v616 = vand.u32 %v24, 4294901760
  %617 = vmatpush1.msra.mxu0 %v616
  %618 = vmatprep.subr.mxu0 0.0
  %v619 = vand.u32 %v23, 4294901760
  %620 = vmatpush1.msra.mxu0 %v619
  %621 = vmatprep.subr.mxu0 0.0
  %v622 = vand.u32 %v22, 4294901760
  %623 = vmatpush1.msra.mxu0 %v622
  %624 = vmatprep.subr.mxu0 0.0
  %v625 = vand.u32 %v21, 4294901760
  %626 = vmatpush1.msra.mxu0 %v625
  %627 = vmatprep.subr.mxu0 0.0
  %v628 = vand.u32 %v20, 4294901760
  %629 = vmatpush1.msra.mxu0 %v628
  %630 = vmatprep.subr.mxu0 0.0
  %v631 = vand.u32 %v19, 4294901760
  %632 = vmatpush1.msra.mxu0 %v631
  %633 = vmatprep.subr.mxu0 0.0
  %v634 = vand.u32 %v18, 4294901760
  %635 = vmatpush1.msra.mxu0 %v634
  %636 = vmatprep.subr.mxu0 0.0
  %637 = vmatpush2.msra.mxu0 0.0
  %638 = vmatprep.subr.mxu0 0.0
  %639 = vmatpush2.msra.mxu0 0.0
  %640 = vmatprep.subr.mxu0 0.0
  %641 = vmatpush2.msra.mxu0 0.0
  %642 = vmatprep.subr.mxu0 0.0
  %643 = vmatpush2.msra.mxu0 0.0
  %644 = vmatprep.subr.mxu0 0.0
  %645 = vmatpush2.msra.mxu0 0.0
  %646 = vmatprep.subr.mxu0 0.0
  %647 = vmatpush2.msra.mxu0 0.0
  %648 = vmatprep.subr.mxu0 0.0
  %649 = vmatpush2.msra.mxu0 0.0
  %650 = vmatprep.subr.mxu0 0.0
  %651 = vmatpush2.msra.mxu0 0.0
  %652 = vmatprep.subr.mxu0 0.0
  %653 = vmatpush2.msra.mxu0 0.0
  %654 = vmatprep.subr.mxu0 0.0
  %655 = vmatpush2.msra.mxu0 0.0
  %656 = vmatprep.subr.mxu0 0.0
  %657 = vmatpush2.msra.mxu0 0.0
  %658 = vmatprep.subr.mxu0 0.0
  %659 = vmatpush2.msra.mxu0 0.0
  %660 = vmatprep.subr.mxu0 0.0
  %661 = vmatpush2.msra.mxu0 0.0
  %662 = vmatprep.subr.mxu0 0.0
  %663 = vmatpush2.msra.mxu0 0.0
  %664 = vmatprep.subr.mxu0 0.0
  %665 = vmatpush2.msra.mxu0 0.0
  %666 = vmatprep.subr.mxu0 0.0
  %667 = vmatpush2.msra.mxu0 0.0
  %668 = vmatprep.mubr.f32.mxu0 0.0
  %v669 = vand.u32 %v17, 4294901760
  %670 = vmatmul.mubr.f32.gmra.mxu0 %v669
  %v671 = vpop.f32.mrf.mxu0
  %v672 = vadd.f32 %v585, %v671
  %v673 = vpop.f32.mrf.mxu0
  %674 = vdwg.mxu0
  %v675 = vmul.f32 %v672, 0.03125
  %v676 = vsub.f32 %v17, %v675
  %v677 = vmul.f32 %v676, %v676
  %678 = vmatprep.subr.mxu0 0.0
  %v679 = vand.u32 %v33, 4294901760
  %680 = vmatpush1.msra.mxu0 %v679
  %681 = vmatprep.subr.mxu0 0.0
  %v682 = vand.u32 %v32, 4294901760
  %683 = vmatpush1.msra.mxu0 %v682
  %684 = vmatprep.subr.mxu0 0.0
  %v685 = vand.u32 %v31, 4294901760
  %686 = vmatpush1.msra.mxu0 %v685
  %687 = vmatprep.subr.mxu0 0.0
  %v688 = vand.u32 %v30, 4294901760
  %689 = vmatpush1.msra.mxu0 %v688
  %690 = vmatprep.subr.mxu0 0.0
  %v691 = vand.u32 %v29, 4294901760
  %692 = vmatpush1.msra.mxu0 %v691
  %693 = vmatprep.subr.mxu0 0.0
  %v694 = vand.u32 %v28, 4294901760
  %695 = vmatpush1.msra.mxu0 %v694
  %696 = vmatprep.subr.mxu0 0.0
  %v697 = vand.u32 %v27, 4294901760
  %698 = vmatpush1.msra.mxu0 %v697
  %699 = vmatprep.subr.mxu0 0.0
  %v700 = vand.u32 %v26, 4294901760
  %701 = vmatpush1.msra.mxu0 %v700
  %702 = vmatprep.subr.mxu0 0.0
  %v703 = vand.u32 %v25, 4294901760
  %704 = vmatpush1.msra.mxu0 %v703
  %705 = vmatprep.subr.mxu0 0.0
  %v706 = vand.u32 %v24, 4294901760
  %707 = vmatpush1.msra.mxu0 %v706
  %708 = vmatprep.subr.mxu0 0.0
  %v709 = vand.u32 %v23, 4294901760
  %710 = vmatpush1.msra.mxu0 %v709
  %711 = vmatprep.subr.mxu0 0.0
  %v712 = vand.u32 %v22, 4294901760
  %713 = vmatpush1.msra.mxu0 %v712
  %714 = vmatprep.subr.mxu0 0.0
  %v715 = vand.u32 %v21, 4294901760
  %716 = vmatpush1.msra.mxu0 %v715
  %717 = vmatprep.subr.mxu0 0.0
  %v718 = vand.u32 %v20, 4294901760
  %719 = vmatpush1.msra.mxu0 %v718
  %720 = vmatprep.subr.mxu0 0.0
  %v721 = vand.u32 %v19, 4294901760
  %722 = vmatpush1.msra.mxu0 %v721
  %723 = vmatprep.subr.mxu0 0.0
  %v724 = vand.u32 %v18, 4294901760
  %725 = vmatpush1.msra.mxu0 %v724
  %726 = vmatprep.subr.mxu0 0.0
  %727 = vmatpush2.msra.mxu0 0.0
  %728 = vmatprep.subr.mxu0 0.0
  %729 = vmatpush2.msra.mxu0 0.0
  %730 = vmatprep.subr.mxu0 0.0
  %731 = vmatpush2.msra.mxu0 0.0
  %732 = vmatprep.subr.mxu0 0.0
  %733 = vmatpush2.msra.mxu0 0.0
  %734 = vmatprep.subr.mxu0 0.0
  %735 = vmatpush2.msra.mxu0 0.0
  %736 = vmatprep.subr.mxu0 0.0
  %737 = vmatpush2.msra.mxu0 0.0
  %738 = vmatprep.subr.mxu0 0.0
  %739 = vmatpush2.msra.mxu0 0.0
  %740 = vmatprep.subr.mxu0 0.0
  %741 = vmatpush2.msra.mxu0 0.0
  %742 = vmatprep.subr.mxu0 0.0
  %743 = vmatpush2.msra.mxu0 0.0
  %744 = vmatprep.subr.mxu0 0.0
  %745 = vmatpush2.msra.mxu0 0.0
  %746 = vmatprep.subr.mxu0 0.0
  %747 = vmatpush2.msra.mxu0 0.0
  %748 = vmatprep.subr.mxu0 0.0
  %749 = vmatpush2.msra.mxu0 0.0
  %750 = vmatprep.subr.mxu0 0.0
  %751 = vmatpush2.msra.mxu0 0.0
  %752 = vmatprep.subr.mxu0 0.0
  %753 = vmatpush2.msra.mxu0 0.0
  %754 = vmatprep.subr.mxu0 0.0
  %755 = vmatpush2.msra.mxu0 0.0
  %756 = vmatprep.subr.mxu0 0.0
  %757 = vmatpush2.msra.mxu0 0.0
  %758 = vmatprep.mubr.f32.mxu0 0.0
  %v759 = vand.u32 %v677, 4294901760
  %v760 = vsub.f32 %v677, %v759
  %v761 = vand.u32 %v760, 4294901760
  %v762 = vsub.f32 %v760, %v761
  %v763 = vand.u32 %v762, 4294901760
  %764 = vmatmul.mubr.f32.gmra.mxu0 %v763
  %v765 = vpop.f32.mrf.mxu0
  %v766 = vadd.f32 0.0, %v765
  %v767 = vpop.f32.mrf.mxu0
  %768 = vdwg.mxu0
  %769 = vmatprep.subr.mxu0 0.0
  %v770 = vand.u32 %v33, 4294901760
  %v771 = vsub.f32 %v33, %v770
  %v772 = vand.u32 %v771, 4294901760
  %v773 = vsub.f32 %v771, %v772
  %v774 = vand.u32 %v773, 4294901760
  %775 = vmatpush1.msra.mxu0 %v774
  %776 = vmatprep.subr.mxu0 0.0
  %v777 = vand.u32 %v32, 4294901760
  %v778 = vsub.f32 %v32, %v777
  %v779 = vand.u32 %v778, 4294901760
  %v780 = vsub.f32 %v778, %v779
  %v781 = vand.u32 %v780, 4294901760
  %782 = vmatpush1.msra.mxu0 %v781
  %783 = vmatprep.subr.mxu0 0.0
  %v784 = vand.u32 %v31, 4294901760
  %v785 = vsub.f32 %v31, %v784
  %v786 = vand.u32 %v785, 4294901760
  %v787 = vsub.f32 %v785, %v786
  %v788 = vand.u32 %v787, 4294901760
  %789 = vmatpush1.msra.mxu0 %v788
  %790 = vmatprep.subr.mxu0 0.0
  %v791 = vand.u32 %v30, 4294901760
  %v792 = vsub.f32 %v30, %v791
  %v793 = vand.u32 %v792, 4294901760
  %v794 = vsub.f32 %v792, %v793
  %v795 = vand.u32 %v794, 4294901760
  %796 = vmatpush1.msra.mxu0 %v795
  %797 = vmatprep.subr.mxu0 0.0
  %v798 = vand.u32 %v29, 4294901760
  %v799 = vsub.f32 %v29, %v798
  %v800 = vand.u32 %v799, 4294901760
  %v801 = vsub.f32 %v799, %v800
  %v802 = vand.u32 %v801, 4294901760
  %803 = vmatpush1.msra.mxu0 %v802
  %804 = vmatprep.subr.mxu0 0.0
  %v805 = vand.u32 %v28, 4294901760
  %v806 = vsub.f32 %v28, %v805
  %v807 = vand.u32 %v806, 4294901760
  %v808 = vsub.f32 %v806, %v807
  %v809 = vand.u32 %v808, 4294901760
  %810 = vmatpush1.msra.mxu0 %v809
  %811 = vmatprep.subr.mxu0 0.0
  %v812 = vand.u32 %v27, 4294901760
  %v813 = vsub.f32 %v27, %v812
  %v814 = vand.u32 %v813, 4294901760
  %v815 = vsub.f32 %v813, %v814
  %v816 = vand.u32 %v815, 4294901760
  %817 = vmatpush1.msra.mxu0 %v816
  %818 = vmatprep.subr.mxu0 0.0
  %v819 = vand.u32 %v26, 4294901760
  %v820 = vsub.f32 %v26, %v819
  %v821 = vand.u32 %v820, 4294901760
  %v822 = vsub.f32 %v820, %v821
  %v823 = vand.u32 %v822, 4294901760
  %824 = vmatpush1.msra.mxu0 %v823
  %825 = vmatprep.subr.mxu0 0.0
  %v826 = vand.u32 %v25, 4294901760
  %v827 = vsub.f32 %v25, %v826
  %v828 = vand.u32 %v827, 4294901760
  %v829 = vsub.f32 %v827, %v828
  %v830 = vand.u32 %v829, 4294901760
  %831 = vmatpush1.msra.mxu0 %v830
  %832 = vmatprep.subr.mxu0 0.0
  %v833 = vand.u32 %v24, 4294901760
  %v834 = vsub.f32 %v24, %v833
  %v835 = vand.u32 %v834, 4294901760
  %v836 = vsub.f32 %v834, %v835
  %v837 = vand.u32 %v836, 4294901760
  %838 = vmatpush1.msra.mxu0 %v837
  %839 = vmatprep.subr.mxu0 0.0
  %v840 = vand.u32 %v23, 4294901760
  %v841 = vsub.f32 %v23, %v840
  %v842 = vand.u32 %v841, 4294901760
  %v843 = vsub.f32 %v841, %v842
  %v844 = vand.u32 %v843, 4294901760
  %845 = vmatpush1.msra.mxu0 %v844
  %846 = vmatprep.subr.mxu0 0.0
  %v847 = vand.u32 %v22, 4294901760
  %v848 = vsub.f32 %v22, %v847
  %v849 = vand.u32 %v848, 4294901760
  %v850 = vsub.f32 %v848, %v849
  %v851 = vand.u32 %v850, 4294901760
  %852 = vmatpush1.msra.mxu0 %v851
  %853 = vmatprep.subr.mxu0 0.0
  %v854 = vand.u32 %v21, 4294901760
  %v855 = vsub.f32 %v21, %v854
  %v856 = vand.u32 %v855, 4294901760
  %v857 = vsub.f32 %v855, %v856
  %v858 = vand.u32 %v857, 4294901760
  %859 = vmatpush1.msra.mxu0 %v858
  %860 = vmatprep.subr.mxu0 0.0
  %v861 = vand.u32 %v20, 4294901760
  %v862 = vsub.f32 %v20, %v861
  %v863 = vand.u32 %v862, 4294901760
  %v864 = vsub.f32 %v862, %v863
  %v865 = vand.u32 %v864, 4294901760
  %866 = vmatpush1.msra.mxu0 %v865
  %867 = vmatprep.subr.mxu0 0.0
  %v868 = vand.u32 %v19, 4294901760
  %v869 = vsub.f32 %v19, %v868
  %v870 = vand.u32 %v869, 4294901760
  %v871 = vsub.f32 %v869, %v870
  %v872 = vand.u32 %v871, 4294901760
  %873 = vmatpush1.msra.mxu0 %v872
  %874 = vmatprep.subr.mxu0 0.0
  %v875 = vand.u32 %v18, 4294901760
  %v876 = vsub.f32 %v18, %v875
  %v877 = vand.u32 %v876, 4294901760
  %v878 = vsub.f32 %v876, %v877
  %v879 = vand.u32 %v878, 4294901760
  %880 = vmatpush1.msra.mxu0 %v879
  %881 = vmatprep.subr.mxu0 0.0
  %882 = vmatpush2.msra.mxu0 0.0
  %883 = vmatprep.subr.mxu0 0.0
  %884 = vmatpush2.msra.mxu0 0.0
  %885 = vmatprep.subr.mxu0 0.0
  %886 = vmatpush2.msra.mxu0 0.0
  %887 = vmatprep.subr.mxu0 0.0
  %888 = vmatpush2.msra.mxu0 0.0
  %889 = vmatprep.subr.mxu0 0.0
  %890 = vmatpush2.msra.mxu0 0.0
  %891 = vmatprep.subr.mxu0 0.0
  %892 = vmatpush2.msra.mxu0 0.0
  %893 = vmatprep.subr.mxu0 0.0
  %894 = vmatpush2.msra.mxu0 0.0
  %895 = vmatprep.subr.mxu0 0.0
  %896 = vmatpush2.msra.mxu0 0.0
  %897 = vmatprep.subr.mxu0 0.0
  %898 = vmatpush2.msra.mxu0 0.0
  %899 = vmatprep.subr.mxu0 0.0
  %900 = vmatpush2.msra.mxu0 0.0
  %901 = vmatprep.subr.mxu0 0.0
  %902 = vmatpush2.msra.mxu0 0.0
  %903 = vmatprep.subr.mxu0 0.0
  %904 = vmatpush2.msra.mxu0 0.0
  %905 = vmatprep.subr.mxu0 0.0
  %906 = vmatpush2.msra.mxu0 0.0
  %907 = vmatprep.subr.mxu0 0.0
  %908 = vmatpush2.msra.mxu0 0.0
  %909 = vmatprep.subr.mxu0 0.0
  %910 = vmatpush2.msra.mxu0 0.0
  %911 = vmatprep.subr.mxu0 0.0
  %912 = vmatpush2.msra.mxu0 0.0
  %913 = vmatprep.mubr.f32.mxu0 0.0
  %v914 = vand.u32 %v677, 4294901760
  %915 = vmatmul.mubr.f32.gmra.mxu0 %v914
  %v916 = vpop.f32.mrf.mxu0
  %v917 = vadd.f32 %v766, %v916
  %v918 = vpop.f32.mrf.mxu0
  %919 = vdwg.mxu0
  %920 = vmatprep.subr.mxu0 0.0
  %v921 = vand.u32 %v33, 4294901760
  %v922 = vsub.f32 %v33, %v921
  %923 = vmatpush1.msra.mxu0 %v922
  %924 = vmatprep.subr.mxu0 0.0
  %v925 = vand.u32 %v32, 4294901760
  %v926 = vsub.f32 %v32, %v925
  %927 = vmatpush1.msra.mxu0 %v926
  %928 = vmatprep.subr.mxu0 0.0
  %v929 = vand.u32 %v31, 4294901760
  %v930 = vsub.f32 %v31, %v929
  %931 = vmatpush1.msra.mxu0 %v930
  %932 = vmatprep.subr.mxu0 0.0
  %v933 = vand.u32 %v30, 4294901760
  %v934 = vsub.f32 %v30, %v933
  %935 = vmatpush1.msra.mxu0 %v934
  %936 = vmatprep.subr.mxu0 0.0
  %v937 = vand.u32 %v29, 4294901760
  %v938 = vsub.f32 %v29, %v937
  %939 = vmatpush1.msra.mxu0 %v938
  %940 = vmatprep.subr.mxu0 0.0
  %v941 = vand.u32 %v28, 4294901760
  %v942 = vsub.f32 %v28, %v941
  %943 = vmatpush1.msra.mxu0 %v942
  %944 = vmatprep.subr.mxu0 0.0
  %v945 = vand.u32 %v27, 4294901760
  %v946 = vsub.f32 %v27, %v945
  %947 = vmatpush1.msra.mxu0 %v946
  %948 = vmatprep.subr.mxu0 0.0
  %v949 = vand.u32 %v26, 4294901760
  %v950 = vsub.f32 %v26, %v949
  %951 = vmatpush1.msra.mxu0 %v950
  %952 = vmatprep.subr.mxu0 0.0
  %v953 = vand.u32 %v25, 4294901760
  %v954 = vsub.f32 %v25, %v953
  %955 = vmatpush1.msra.mxu0 %v954
  %956 = vmatprep.subr.mxu0 0.0
  %v957 = vand.u32 %v24, 4294901760
  %v958 = vsub.f32 %v24, %v957
  %959 = vmatpush1.msra.mxu0 %v958
  %960 = vmatprep.subr.mxu0 0.0
  %v961 = vand.u32 %v23, 4294901760
  %v962 = vsub.f32 %v23, %v961
  %963 = vmatpush1.msra.mxu0 %v962
  %964 = vmatprep.subr.mxu0 0.0
  %v965 = vand.u32 %v22, 4294901760
  %v966 = vsub.f32 %v22, %v965
  %967 = vmatpush1.msra.mxu0 %v966
  %968 = vmatprep.subr.mxu0 0.0
  %v969 = vand.u32 %v21, 4294901760
  %v970 = vsub.f32 %v21, %v969
  %971 = vmatpush1.msra.mxu0 %v970
  %972 = vmatprep.subr.mxu0 0.0
  %v973 = vand.u32 %v20, 4294901760
  %v974 = vsub.f32 %v20, %v973
  %975 = vmatpush1.msra.mxu0 %v974
  %976 = vmatprep.subr.mxu0 0.0
  %v977 = vand.u32 %v19, 4294901760
  %v978 = vsub.f32 %v19, %v977
  %979 = vmatpush1.msra.mxu0 %v978
  %980 = vmatprep.subr.mxu0 0.0
  %v981 = vand.u32 %v18, 4294901760
  %v982 = vsub.f32 %v18, %v981
  %983 = vmatpush1.msra.mxu0 %v982
  %984 = vmatprep.subr.mxu0 0.0
  %985 = vmatpush2.msra.mxu0 0.0
  %986 = vmatprep.subr.mxu0 0.0
  %987 = vmatpush2.msra.mxu0 0.0
  %988 = vmatprep.subr.mxu0 0.0
  %989 = vmatpush2.msra.mxu0 0.0
  %990 = vmatprep.subr.mxu0 0.0
  %991 = vmatpush2.msra.mxu0 0.0
  %992 = vmatprep.subr.mxu0 0.0
  %993 = vmatpush2.msra.mxu0 0.0
  %994 = vmatprep.subr.mxu0 0.0
  %995 = vmatpush2.msra.mxu0 0.0
  %996 = vmatprep.subr.mxu0 0.0
  %997 = vmatpush2.msra.mxu0 0.0
  %998 = vmatprep.subr.mxu0 0.0
  %999 = vmatpush2.msra.mxu0 0.0
  %1000 = vmatprep.subr.mxu0 0.0
  %1001 = vmatpush2.msra.mxu0 0.0
  %1002 = vmatprep.subr.mxu0 0.0
  %1003 = vmatpush2.msra.mxu0 0.0
  %1004 = vmatprep.subr.mxu0 0.0
  %1005 = vmatpush2.msra.mxu0 0.0
  %1006 = vmatprep.subr.mxu0 0.0
  %1007 = vmatpush2.msra.mxu0 0.0
  %1008 = vmatprep.subr.mxu0 0.0
  %1009 = vmatpush2.msra.mxu0 0.0
  %1010 = vmatprep.subr.mxu0 0.0
  %1011 = vmatpush2.msra.mxu0 0.0
  %1012 = vmatprep.subr.mxu0 0.0
  %1013 = vmatpush2.msra.mxu0 0.0
  %1014 = vmatprep.subr.mxu0 0.0
  %1015 = vmatpush2.msra.mxu0 0.0
  %1016 = vmatprep.mubr.f32.mxu0 0.0
  %v1017 = vand.u32 %v677, 4294901760
  %v1018 = vsub.f32 %v677, %v1017
  %1019 = vmatmul.mubr.f32.gmra.mxu0 %v1018
  %v1020 = vpop.f32.mrf.mxu0
  %v1021 = vadd.f32 %v917, %v1020
  %v1022 = vpop.f32.mrf.mxu0
  %1023 = vdwg.mxu0
  %1024 = vmatprep.subr.mxu0 0.0
  %v1025 = vand.u32 %v33, 4294901760
  %1026 = vmatpush1.msra.mxu0 %v1025
  %1027 = vmatprep.subr.mxu0 0.0
  %v1028 = vand.u32 %v32, 4294901760
  %1029 = vmatpush1.msra.mxu0 %v1028
  %1030 = vmatprep.subr.mxu0 0.0
  %v1031 = vand.u32 %v31, 4294901760
  %1032 = vmatpush1.msra.mxu0 %v1031
  %1033 = vmatprep.subr.mxu0 0.0
  %v1034 = vand.u32 %v30, 4294901760
  %1035 = vmatpush1.msra.mxu0 %v1034
  %1036 = vmatprep.subr.mxu0 0.0
  %v1037 = vand.u32 %v29, 4294901760
  %1038 = vmatpush1.msra.mxu0 %v1037
  %1039 = vmatprep.subr.mxu0 0.0
  %v1040 = vand.u32 %v28, 4294901760
  %1041 = vmatpush1.msra.mxu0 %v1040
  %1042 = vmatprep.subr.mxu0 0.0
  %v1043 = vand.u32 %v27, 4294901760
  %1044 = vmatpush1.msra.mxu0 %v1043
  %1045 = vmatprep.subr.mxu0 0.0
  %v1046 = vand.u32 %v26, 4294901760
  %1047 = vmatpush1.msra.mxu0 %v1046
  %1048 = vmatprep.subr.mxu0 0.0
  %v1049 = vand.u32 %v25, 4294901760
  %1050 = vmatpush1.msra.mxu0 %v1049
  %1051 = vmatprep.subr.mxu0 0.0
  %v1052 = vand.u32 %v24, 4294901760
  %1053 = vmatpush1.msra.mxu0 %v1052
  %1054 = vmatprep.subr.mxu0 0.0
  %v1055 = vand.u32 %v23, 4294901760
  %1056 = vmatpush1.msra.mxu0 %v1055
  %1057 = vmatprep.subr.mxu0 0.0
  %v1058 = vand.u32 %v22, 4294901760
  %1059 = vmatpush1.msra.mxu0 %v1058
  %1060 = vmatprep.subr.mxu0 0.0
  %v1061 = vand.u32 %v21, 4294901760
  %1062 = vmatpush1.msra.mxu0 %v1061
  %1063 = vmatprep.subr.mxu0 0.0
  %v1064 = vand.u32 %v20, 4294901760
  %1065 = vmatpush1.msra.mxu0 %v1064
  %1066 = vmatprep.subr.mxu0 0.0
  %v1067 = vand.u32 %v19, 4294901760
  %1068 = vmatpush1.msra.mxu0 %v1067
  %1069 = vmatprep.subr.mxu0 0.0
  %v1070 = vand.u32 %v18, 4294901760
  %1071 = vmatpush1.msra.mxu0 %v1070
  %1072 = vmatprep.subr.mxu0 0.0
  %1073 = vmatpush2.msra.mxu0 0.0
  %1074 = vmatprep.subr.mxu0 0.0
  %1075 = vmatpush2.msra.mxu0 0.0
  %1076 = vmatprep.subr.mxu0 0.0
  %1077 = vmatpush2.msra.mxu0 0.0
  %1078 = vmatprep.subr.mxu0 0.0
  %1079 = vmatpush2.msra.mxu0 0.0
  %1080 = vmatprep.subr.mxu0 0.0
  %1081 = vmatpush2.msra.mxu0 0.0
  %1082 = vmatprep.subr.mxu0 0.0
  %1083 = vmatpush2.msra.mxu0 0.0
  %1084 = vmatprep.subr.mxu0 0.0
  %1085 = vmatpush2.msra.mxu0 0.0
  %1086 = vmatprep.subr.mxu0 0.0
  %1087 = vmatpush2.msra.mxu0 0.0
  %1088 = vmatprep.subr.mxu0 0.0
  %1089 = vmatpush2.msra.mxu0 0.0
  %1090 = vmatprep.subr.mxu0 0.0
  %1091 = vmatpush2.msra.mxu0 0.0
  %1092 = vmatprep.subr.mxu0 0.0
  %1093 = vmatpush2.msra.mxu0 0.0
  %1094 = vmatprep.subr.mxu0 0.0
  %1095 = vmatpush2.msra.mxu0 0.0
  %1096 = vmatprep.subr.mxu0 0.0
  %1097 = vmatpush2.msra.mxu0 0.0
  %1098 = vmatprep.subr.mxu0 0.0
  %1099 = vmatpush2.msra.mxu0 0.0
  %1100 = vmatprep.subr.mxu0 0.0
  %1101 = vmatpush2.msra.mxu0 0.0
  %1102 = vmatprep.subr.mxu0 0.0
  %1103 = vmatpush2.msra.mxu0 0.0
  %1104 = vmatprep.mubr.f32.mxu0 0.0
  %v1105 = vand.u32 %v677, 4294901760
  %v1106 = vsub.f32 %v677, %v1105
  %v1107 = vand.u32 %v1106, 4294901760
  %1108 = vmatmul.mubr.f32.gmra.mxu0 %v1107
  %v1109 = vpop.f32.mrf.mxu0
  %v1110 = vadd.f32 %v1021, %v1109
  %v1111 = vpop.f32.mrf.mxu0
  %1112 = vdwg.mxu0
  %1113 = vmatprep.subr.mxu0 0.0
  %v1114 = vand.u32 %v33, 4294901760
  %v1115 = vsub.f32 %v33, %v1114
  %v1116 = vand.u32 %v1115, 4294901760
  %1117 = vmatpush1.msra.mxu0 %v1116
  %1118 = vmatprep.subr.mxu0 0.0
  %v1119 = vand.u32 %v32, 4294901760
  %v1120 = vsub.f32 %v32, %v1119
  %v1121 = vand.u32 %v1120, 4294901760
  %1122 = vmatpush1.msra.mxu0 %v1121
  %1123 = vmatprep.subr.mxu0 0.0
  %v1124 = vand.u32 %v31, 4294901760
  %v1125 = vsub.f32 %v31, %v1124
  %v1126 = vand.u32 %v1125, 4294901760
  %1127 = vmatpush1.msra.mxu0 %v1126
  %1128 = vmatprep.subr.mxu0 0.0
  %v1129 = vand.u32 %v30, 4294901760
  %v1130 = vsub.f32 %v30, %v1129
  %v1131 = vand.u32 %v1130, 4294901760
  %1132 = vmatpush1.msra.mxu0 %v1131
  %1133 = vmatprep.subr.mxu0 0.0
  %v1134 = vand.u32 %v29, 4294901760
  %v1135 = vsub.f32 %v29, %v1134
  %v1136 = vand.u32 %v1135, 4294901760
  %1137 = vmatpush1.msra.mxu0 %v1136
  %1138 = vmatprep.subr.mxu0 0.0
  %v1139 = vand.u32 %v28, 4294901760
  %v1140 = vsub.f32 %v28, %v1139
  %v1141 = vand.u32 %v1140, 4294901760
  %1142 = vmatpush1.msra.mxu0 %v1141
  %1143 = vmatprep.subr.mxu0 0.0
  %v1144 = vand.u32 %v27, 4294901760
  %v1145 = vsub.f32 %v27, %v1144
  %v1146 = vand.u32 %v1145, 4294901760
  %1147 = vmatpush1.msra.mxu0 %v1146
  %1148 = vmatprep.subr.mxu0 0.0
  %v1149 = vand.u32 %v26, 4294901760
  %v1150 = vsub.f32 %v26, %v1149
  %v1151 = vand.u32 %v1150, 4294901760
  %1152 = vmatpush1.msra.mxu0 %v1151
  %1153 = vmatprep.subr.mxu0 0.0
  %v1154 = vand.u32 %v25, 4294901760
  %v1155 = vsub.f32 %v25, %v1154
  %v1156 = vand.u32 %v1155, 4294901760
  %1157 = vmatpush1.msra.mxu0 %v1156
  %1158 = vmatprep.subr.mxu0 0.0
  %v1159 = vand.u32 %v24, 4294901760
  %v1160 = vsub.f32 %v24, %v1159
  %v1161 = vand.u32 %v1160, 4294901760
  %1162 = vmatpush1.msra.mxu0 %v1161
  %1163 = vmatprep.subr.mxu0 0.0
  %v1164 = vand.u32 %v23, 4294901760
  %v1165 = vsub.f32 %v23, %v1164
  %v1166 = vand.u32 %v1165, 4294901760
  %1167 = vmatpush1.msra.mxu0 %v1166
  %1168 = vmatprep.subr.mxu0 0.0
  %v1169 = vand.u32 %v22, 4294901760
  %v1170 = vsub.f32 %v22, %v1169
  %v1171 = vand.u32 %v1170, 4294901760
  %1172 = vmatpush1.msra.mxu0 %v1171
  %1173 = vmatprep.subr.mxu0 0.0
  %v1174 = vand.u32 %v21, 4294901760
  %v1175 = vsub.f32 %v21, %v1174
  %v1176 = vand.u32 %v1175, 4294901760
  %1177 = vmatpush1.msra.mxu0 %v1176
  %1178 = vmatprep.subr.mxu0 0.0
  %v1179 = vand.u32 %v20, 4294901760
  %v1180 = vsub.f32 %v20, %v1179
  %v1181 = vand.u32 %v1180, 4294901760
  %1182 = vmatpush1.msra.mxu0 %v1181
  %1183 = vmatprep.subr.mxu0 0.0
  %v1184 = vand.u32 %v19, 4294901760
  %v1185 = vsub.f32 %v19, %v1184
  %v1186 = vand.u32 %v1185, 4294901760
  %1187 = vmatpush1.msra.mxu0 %v1186
  %1188 = vmatprep.subr.mxu0 0.0
  %v1189 = vand.u32 %v18, 4294901760
  %v1190 = vsub.f32 %v18, %v1189
  %v1191 = vand.u32 %v1190, 4294901760
  %1192 = vmatpush1.msra.mxu0 %v1191
  %1193 = vmatprep.subr.mxu0 0.0
  %1194 = vmatpush2.msra.mxu0 0.0
  %1195 = vmatprep.subr.mxu0 0.0
  %1196 = vmatpush2.msra.mxu0 0.0
  %1197 = vmatprep.subr.mxu0 0.0
  %1198 = vmatpush2.msra.mxu0 0.0
  %1199 = vmatprep.subr.mxu0 0.0
  %1200 = vmatpush2.msra.mxu0 0.0
  %1201 = vmatprep.subr.mxu0 0.0
  %1202 = vmatpush2.msra.mxu0 0.0
  %1203 = vmatprep.subr.mxu0 0.0
  %1204 = vmatpush2.msra.mxu0 0.0
  %1205 = vmatprep.subr.mxu0 0.0
  %1206 = vmatpush2.msra.mxu0 0.0
  %1207 = vmatprep.subr.mxu0 0.0
  %1208 = vmatpush2.msra.mxu0 0.0
  %1209 = vmatprep.subr.mxu0 0.0
  %1210 = vmatpush2.msra.mxu0 0.0
  %1211 = vmatprep.subr.mxu0 0.0
  %1212 = vmatpush2.msra.mxu0 0.0
  %1213 = vmatprep.subr.mxu0 0.0
  %1214 = vmatpush2.msra.mxu0 0.0
  %1215 = vmatprep.subr.mxu0 0.0
  %1216 = vmatpush2.msra.mxu0 0.0
  %1217 = vmatprep.subr.mxu0 0.0
  %1218 = vmatpush2.msra.mxu0 0.0
  %1219 = vmatprep.subr.mxu0 0.0
  %1220 = vmatpush2.msra.mxu0 0.0
  %1221 = vmatprep.subr.mxu0 0.0
  %1222 = vmatpush2.msra.mxu0 0.0
  %1223 = vmatprep.subr.mxu0 0.0
  %1224 = vmatpush2.msra.mxu0 0.0
  %1225 = vmatprep.mubr.f32.mxu0 0.0
  %v1226 = vand.u32 %v677, 4294901760
  %1227 = vmatmul.mubr.f32.gmra.mxu0 %v1226
  %v1228 = vpop.f32.mrf.mxu0
  %v1229 = vadd.f32 %v1110, %v1228
  %v1230 = vpop.f32.mrf.mxu0
  %1231 = vdwg.mxu0
  %1232 = vmatprep.subr.mxu0 0.0
  %v1233 = vand.u32 %v33, 4294901760
  %1234 = vmatpush1.msra.mxu0 %v1233
  %1235 = vmatprep.subr.mxu0 0.0
  %v1236 = vand.u32 %v32, 4294901760
  %1237 = vmatpush1.msra.mxu0 %v1236
  %1238 = vmatprep.subr.mxu0 0.0
  %v1239 = vand.u32 %v31, 4294901760
  %1240 = vmatpush1.msra.mxu0 %v1239
  %1241 = vmatprep.subr.mxu0 0.0
  %v1242 = vand.u32 %v30, 4294901760
  %1243 = vmatpush1.msra.mxu0 %v1242
  %1244 = vmatprep.subr.mxu0 0.0
  %v1245 = vand.u32 %v29, 4294901760
  %1246 = vmatpush1.msra.mxu0 %v1245
  %1247 = vmatprep.subr.mxu0 0.0
  %v1248 = vand.u32 %v28, 4294901760
  %1249 = vmatpush1.msra.mxu0 %v1248
  %1250 = vmatprep.subr.mxu0 0.0
  %v1251 = vand.u32 %v27, 4294901760
  %1252 = vmatpush1.msra.mxu0 %v1251
  %1253 = vmatprep.subr.mxu0 0.0
  %v1254 = vand.u32 %v26, 4294901760
  %1255 = vmatpush1.msra.mxu0 %v1254
  %1256 = vmatprep.subr.mxu0 0.0
  %v1257 = vand.u32 %v25, 4294901760
  %1258 = vmatpush1.msra.mxu0 %v1257
  %1259 = vmatprep.subr.mxu0 0.0
  %v1260 = vand.u32 %v24, 4294901760
  %1261 = vmatpush1.msra.mxu0 %v1260
  %1262 = vmatprep.subr.mxu0 0.0
  %v1263 = vand.u32 %v23, 4294901760
  %1264 = vmatpush1.msra.mxu0 %v1263
  %1265 = vmatprep.subr.mxu0 0.0
  %v1266 = vand.u32 %v22, 4294901760
  %1267 = vmatpush1.msra.mxu0 %v1266
  %1268 = vmatprep.subr.mxu0 0.0
  %v1269 = vand.u32 %v21, 4294901760
  %1270 = vmatpush1.msra.mxu0 %v1269
  %1271 = vmatprep.subr.mxu0 0.0
  %v1272 = vand.u32 %v20, 4294901760
  %1273 = vmatpush1.msra.mxu0 %v1272
  %1274 = vmatprep.subr.mxu0 0.0
  %v1275 = vand.u32 %v19, 4294901760
  %1276 = vmatpush1.msra.mxu0 %v1275
  %1277 = vmatprep.subr.mxu0 0.0
  %v1278 = vand.u32 %v18, 4294901760
  %1279 = vmatpush1.msra.mxu0 %v1278
  %1280 = vmatprep.subr.mxu0 0.0
  %1281 = vmatpush2.msra.mxu0 0.0
  %1282 = vmatprep.subr.mxu0 0.0
  %1283 = vmatpush2.msra.mxu0 0.0
  %1284 = vmatprep.subr.mxu0 0.0
  %1285 = vmatpush2.msra.mxu0 0.0
  %1286 = vmatprep.subr.mxu0 0.0
  %1287 = vmatpush2.msra.mxu0 0.0
  %1288 = vmatprep.subr.mxu0 0.0
  %1289 = vmatpush2.msra.mxu0 0.0
  %1290 = vmatprep.subr.mxu0 0.0
  %1291 = vmatpush2.msra.mxu0 0.0
  %1292 = vmatprep.subr.mxu0 0.0
  %1293 = vmatpush2.msra.mxu0 0.0
  %1294 = vmatprep.subr.mxu0 0.0
  %1295 = vmatpush2.msra.mxu0 0.0
  %1296 = vmatprep.subr.mxu0 0.0
  %1297 = vmatpush2.msra.mxu0 0.0
  %1298 = vmatprep.subr.mxu0 0.0
  %1299 = vmatpush2.msra.mxu0 0.0
  %1300 = vmatprep.subr.mxu0 0.0
  %1301 = vmatpush2.msra.mxu0 0.0
  %1302 = vmatprep.subr.mxu0 0.0
  %1303 = vmatpush2.msra.mxu0 0.0
  %1304 = vmatprep.subr.mxu0 0.0
  %1305 = vmatpush2.msra.mxu0 0.0
  %1306 = vmatprep.subr.mxu0 0.0
  %1307 = vmatpush2.msra.mxu0 0.0
  %1308 = vmatprep.subr.mxu0 0.0
  %1309 = vmatpush2.msra.mxu0 0.0
  %1310 = vmatprep.subr.mxu0 0.0
  %1311 = vmatpush2.msra.mxu0 0.0
  %1312 = vmatprep.mubr.f32.mxu0 0.0
  %v1313 = vand.u32 %v677, 4294901760
  %1314 = vmatmul.mubr.f32.gmra.mxu0 %v1313
  %v1315 = vpop.f32.mrf.mxu0
  %v1316 = vadd.f32 %v1229, %v1315
  %v1317 = vpop.f32.mrf.mxu0
  %1318 = vdwg.mxu0
  %v1319 = vmul.f32 %v1316, 0.03125
  %v1320 = vadd.f32 %v1319, 1e-05
  %v1321 = vrsqrt.pop %v1320
  %v1322 = vld [vmem:[%s2] sm:$0x1]
  %v1324 = vlaneseq
  %v1325 = vshrl.u32 %v1324, 7
  %v1326 = vsub.s32 0, %v1325
  %v1327 = vrot.slane %v1322, %v1326
  %v1329 = vmul.f32 %v1321, %v1327
  %v1330 = vmul.f32 %v676, %v1329
  %v1331 = vld [vmem:[%s3] sm:$0x1]
  %v1333 = vlaneseq
  %v1334 = vshrl.u32 %v1333, 7
  %v1335 = vsub.s32 0, %v1334
  %v1336 = vrot.slane %v1331, %v1335
  %v1338 = vadd.f32 %v1330, %v1336
  %1339 = vst [vmem:[%s4] sm:$0xf] %v1338
  // Predicated region
  $region18: #{layer_norm.1} parent=0 // pred_check
    _
  $region19: #{layer_norm.1} parent=0 // pred_check_branch
    %1341 = sbr.rel (0) target = $region21
  $region20: #{layer_norm.1} parent=0 // pred_region
    _
  $region21: #{layer_norm.1} parent=0 // pred_fallthru
    _
  // Predicated region
  $region22: #{layer_norm.1} parent=0 // pred_check
    _
  $region23: #{layer_norm.1} parent=0 // pred_check_branch
    %1343 = sbr.rel (0) target = $region25
  $region24: #{layer_norm.1} parent=0 // pred_region
    _
  $region25: #{layer_norm.1} parent=0 // pred_fallthru
    _

</llo_original>
